<compile_context>
chip_gen: v6e
topology: v6e:2x2x1
jax: 0.10.0
libtpu: 0.0.40
codegen_flags: <defaults>
</compile_context>

<pallas_src>
import functools

import jax
import jax.numpy as jnp
from jax import lax
from jax.experimental import pallas as pl
from jax.experimental.pallas import tpu as pltpu


# ------------------------------- Pallas kernel -------------------------------

def _pos_map_kernel(wl_ref, bias_ref, x_ref, o_ref, *, chunk):
    # wl_ref   : (N, N, D) f32, wl[n, m, d] = posmap[d % gamma, m, n]  (resident)
    # bias_ref : (N, D)    f32, bias[m, d]  = token_proj_n_bias[m]     (resident)
    # x_ref    : (TILE_B, N, D)  whole windows, channels-last (lane dim)
    # o_ref    : (TILE_B, N, D)  same dtype as x
    tile_b, n_tok, _ = x_ref.shape
    wl = wl_ref[...]            # 8 vregs for N=8, D=128
    bias = bias_ref[...]        # 1 vreg
    num_chunks = tile_b // chunk    # wrapper guarantees divisibility

    def body(ci, carry):
        start = pl.multiple_of(ci * chunk, chunk)
        xb = x_ref[pl.ds(start, chunk), :, :]               # (chunk, N, D)
        # out[b, m, d] = bias[m] + sum_n wl[n, m, d] * x[b, n, d]   (exact f32)
        acc = bias[None, :, :] + wl[0][None, :, :] * xb[:, 0:1, :].astype(jnp.float32)
        for n in range(1, n_tok):                           # N is tiny & static
            acc = acc + wl[n][None, :, :] * xb[:, n:n + 1, :].astype(jnp.float32)
        o_ref[pl.ds(start, chunk), :, :] = acc.astype(o_ref.dtype)
        return carry

    lax.fori_loop(0, num_chunks, body, 0)


def _pos_map_pallas(xf, w_lane, bias_md, *, tile_b, chunk):
    """xf: (BW, N, Dp); w_lane: (N, N, Dp); bias_md: (N, Dp)."""
    BW, N, Dp = xf.shape
    kernel = functools.partial(_pos_map_kernel, chunk=chunk)
    return pl.pallas_call(
        kernel,
        out_shape=jax.ShapeDtypeStruct((BW, N, Dp), xf.dtype),
        grid=(pl.cdiv(BW, tile_b),),
        in_specs=[
            pl.BlockSpec((N, N, Dp), lambda b: (0, 0, 0)),   # w_lane: resident
            pl.BlockSpec((N, Dp), lambda b: (0, 0)),         # bias:   resident
            pl.BlockSpec((tile_b, N, Dp), lambda b: (b, 0, 0)),
        ],
        out_specs=pl.BlockSpec((tile_b, N, Dp), lambda b: (b, 0, 0)),
        compiler_params=pltpu.CompilerParams(
            dimension_semantics=("parallel",),
            # 2x(in+out) double-buffers of the largest tile (<=4 MiB) + tiny
            # residents stay well under 32 MiB; <= physical VMEM on v5e/v6e/v7x.
            vmem_limit_bytes=32 * 1024 * 1024,
        ),
    )(w_lane, bias_md, xf)


# ------------------------------ tiling heuristic ------------------------------

def _pick_tile_b(BW, N, Dp, itemsize):
    kind = ""
    try:
        kind = jax.devices()[0].device_kind.lower()
    except Exception:
        pass
    # Target x-block bytes: ~2 MiB on v5e/v6e, ~4 MiB on v7x/unknown (per-step
    # overhead amortization); pipelined total stays under the requested 32 MiB.
    target = (2 << 20) if ("v5" in kind or "v6" in kind) else (4 << 20)
    bytes_per_window = max(1, N * Dp * itemsize)
    tile_b = min(2048, max(1, target // bytes_per_window))
    if BW <= tile_b:
        return BW
    tile_b = max(8, (tile_b // 8) * 8)          # multiple of the in-kernel chunk
    steps = pl.cdiv(BW, tile_b)
    if steps > 1 and steps % 2 == 1:            # even grid -> both v7x TCs busy
        tile_b = max(8, ((pl.cdiv(BW, steps + 1) + 7) // 8) * 8)
    return tile_b


# ---------------------------------- wrapper ----------------------------------

def learned_pos_map_forward(x, table, bias, *, win_size, gamma=1, tile_b=None):
    """x: (B, W, N, D) with N == win_size, D % gamma == 0.
    table: (2*win_size - 1, gamma)   window_relative_position_bias_table
    bias : (1, win_size, 1)          token_proj_n_bias
    Returns (B, W, N, D), same dtype as x."""
    B, W, N, D = x.shape
    assert N == win_size and D % gamma == 0

    BW = B * W
    Dp = ((D + 127) // 128) * 128               # lane-dense (unmasked vst)
    xf = x.reshape(BW, N, D)                    # free reshape, no transpose
    if Dp != D:
        xf = jnp.pad(xf, ((0, 0), (0, 0), (0, Dp - D)))

    # posmap gather (forward_pos) + per-lane weight, tiny -> plain JAX here.
    rel = jnp.arange(N)[:, None] - jnp.arange(N)[None, :] + (N - 1)    # (N, N)
    posmap = jnp.transpose(table[rel], (2, 0, 1)).astype(jnp.float32)  # (g, m, n)
    ch_group = jnp.arange(Dp) % gamma
    # w_lane[n, m, d] = posmap[d % gamma, m, n]  — folds gamma grouping into the
    # weight, so the kernel needs no mask and no per-group matmul loop.
    w_lane = jnp.transpose(posmap[ch_group], (2, 1, 0))                # (n, m, Dp)
    bias_md = jnp.broadcast_to(bias.reshape(N, 1).astype(jnp.float32), (N, Dp))

    itemsize = jnp.dtype(xf.dtype).itemsize
    if tile_b is None:
        tile_b = _pick_tile_b(BW, N, Dp, itemsize)
    tile_b = max(1, min(tile_b, BW))
    chunk = next(c for c in (8, 4, 2, 1) if tile_b % c == 0)

    out = _pos_map_pallas(xf, w_lane, bias_md, tile_b=tile_b, chunk=chunk)
    if Dp != D:
        out = out[:, :, :D]
    return out.reshape(B, W, N, D)


# ------------------------------ reference (JAX) ------------------------------

def reference_forward(x, table, bias, win_size, gamma):
    B, W, N, D = x.shape
    V = D // gamma
    rel = jnp.arange(N)[:, None] - jnp.arange(N)[None, :] + (N - 1)
    posmap = jnp.transpose(table[rel], (2, 0, 1)).astype(jnp.float32)  # (g, m, n)
    x5 = x.astype(jnp.float32).reshape(B, W, N, V, gamma)
    y = jnp.einsum('smn,bwnvs->bwmvs', posmap, x5,
                   precision=lax.Precision.HIGHEST)
    y = y + bias.reshape(1, 1, N, 1, 1)
    return y.reshape(B, W, N, D)


# ------------------------------------ main ------------------------------------

if __name__ == "__main__":
    B, W, win_size = 2, 4, 8                    # batch, windows, tokens/window
    key = jax.random.PRNGKey(0)

    configs = [
        # gamma, V,   dtype,         atol, rtol
        (1, 128, jnp.float32, 1e-5, 1e-5),      # gamma==1, D=128 lane-dense
        (2, 64, jnp.float32, 1e-5, 1e-5),       # gamma>1 via per-lane weight
        (3, 32, jnp.float32, 1e-5, 1e-5),       # D=96 -> channel pad to 128
        (2, 64, jnp.bfloat16, 1e-2, 1e-2),      # bf16 in / bf16 out path
    ]
    for gamma, V, dtype, atol, rtol in configs:
        D = V * gamma
        key, k1, k2, k3 = jax.random.split(key, 4)
        x = jax.random.normal(k1, (B, W, win_size, D), jnp.float32).astype(dtype)
        # trunc_normal(std=0.02) approximated with a plain normal; bias is zeros
        # in the module but randomized here to exercise the bias-add path.
        table = 0.02 * jax.random.normal(k2, (2 * win_size - 1, gamma),
                                         jnp.float32)
        bias = 0.02 * jax.random.normal(k3, (1, win_size, 1), jnp.float32)

        out = jax.block_until_ready(
            learned_pos_map_forward(x, table, bias,
                                    win_size=win_size, gamma=gamma))
        ref = jax.block_until_ready(
            reference_forward(x, table, bias, win_size, gamma))

        assert out.shape == x.shape and out.dtype == x.dtype, (out.shape, out.dtype)
        err = float(jnp.max(jnp.abs(out.astype(jnp.float32) - ref)))
        assert bool(jnp.allclose(out.astype(jnp.float32), ref,
                                 atol=atol, rtol=rtol)), (gamma, V, str(dtype), err)

    print("KERNEL_OK")
</pallas_src>

<mosaic_0001>
module attributes {stable_mosaic.version = 11 : i64} {
  func.func @_pos_map_kernel(%arg0: i32, %arg1: memref<8x8x128xf32, #tpu.memory_space<vmem>>, %arg2: memref<8x128xf32, #tpu.memory_space<vmem>>, %arg3: memref<8x8x128xf32, #tpu.memory_space<vmem>>, %arg4: memref<8x8x128xf32, #tpu.memory_space<vmem>>) attributes {dimension_semantics = [#tpu.dimension_semantics<parallel>], iteration_bounds = array<i64: 1>, scalar_prefetch = 0 : i64, scratch_operands = 0 : i64, tpu.core_type = #tpu.core_type<tc>, window_params = [{pipeline_mode = #tpu.pipeline_mode<synchronous>, transform_indices = @transform_0, window_bounds = array<i64: 8, 8, 128>}, {pipeline_mode = #tpu.pipeline_mode<synchronous>, transform_indices = @transform_1, window_bounds = array<i64: 8, 128>}, {transform_indices = @transform_2, window_bounds = array<i64: 8, 8, 128>}, {transform_indices = @transform_3, window_bounds = array<i64: 8, 8, 128>}]} {
    %c0 = arith.constant 0 : index
    %c0_0 = arith.constant 0 : index
    %c0_1 = arith.constant 0 : index
    %0 = vector.load %arg1[%c0, %c0_0, %c0_1] : memref<8x8x128xf32, #tpu.memory_space<vmem>>, vector<8x8x128xf32>
    %c0_2 = arith.constant 0 : index
    %c0_3 = arith.constant 0 : index
    %1 = vector.load %arg2[%c0_2, %c0_3] : memref<8x128xf32, #tpu.memory_space<vmem>>, vector<8x128xf32>
    %c0_i32 = arith.constant 0 : i32
    %c8_i32 = arith.constant 8 : i32
    %2 = arith.muli %c0_i32, %c8_i32 : i32
    %3 = tpu.assume_multiple %2, 8 : i32
    %4 = arith.index_cast %3 : i32 to index
    %c0_4 = arith.constant 0 : index
    %c0_5 = arith.constant 0 : index
    %5 = vector.load %arg3[%4, %c0_4, %c0_5] : memref<8x8x128xf32, #tpu.memory_space<vmem>>, vector<8x8x128xf32>
    %6 = vector.shape_cast %1 : vector<8x128xf32> to vector<1x8x128xf32>
    %7 = vector.extract_strided_slice %0 {offsets = [0, 0, 0], sizes = [1, 8, 128], strides = [1, 1, 1]} : vector<8x8x128xf32> to vector<1x8x128xf32>
    %8 = vector.shape_cast %7 : vector<1x8x128xf32> to vector<8x128xf32>
    %9 = vector.shape_cast %8 : vector<8x128xf32> to vector<1x8x128xf32>
    %10 = vector.extract_strided_slice %5 {offsets = [0, 0, 0], sizes = [8, 1, 128], strides = [1, 1, 1]} : vector<8x8x128xf32> to vector<8x1x128xf32>
    %11 = vector.broadcast %9 : vector<1x8x128xf32> to vector<8x8x128xf32>
    %12 = vector.broadcast %10 : vector<8x1x128xf32> to vector<8x8x128xf32>
    %13 = arith.mulf %11, %12 : vector<8x8x128xf32>
    %14 = vector.broadcast %6 : vector<1x8x128xf32> to vector<8x8x128xf32>
    %15 = arith.addf %14, %13 : vector<8x8x128xf32>
    %16 = vector.extract_strided_slice %0 {offsets = [1, 0, 0], sizes = [1, 8, 128], strides = [1, 1, 1]} : vector<8x8x128xf32> to vector<1x8x128xf32>
    %17 = vector.shape_cast %16 : vector<1x8x128xf32> to vector<8x128xf32>
    %18 = vector.shape_cast %17 : vector<8x128xf32> to vector<1x8x128xf32>
    %19 = vector.extract_strided_slice %5 {offsets = [0, 1, 0], sizes = [8, 1, 128], strides = [1, 1, 1]} : vector<8x8x128xf32> to vector<8x1x128xf32>
    %20 = vector.broadcast %18 : vector<1x8x128xf32> to vector<8x8x128xf32>
    %21 = vector.broadcast %19 : vector<8x1x128xf32> to vector<8x8x128xf32>
    %22 = arith.mulf %20, %21 : vector<8x8x128xf32>
    %23 = arith.addf %15, %22 : vector<8x8x128xf32>
    %24 = vector.extract_strided_slice %0 {offsets = [2, 0, 0], sizes = [1, 8, 128], strides = [1, 1, 1]} : vector<8x8x128xf32> to vector<1x8x128xf32>
    %25 = vector.shape_cast %24 : vector<1x8x128xf32> to vector<8x128xf32>
    %26 = vector.shape_cast %25 : vector<8x128xf32> to vector<1x8x128xf32>
    %27 = vector.extract_strided_slice %5 {offsets = [0, 2, 0], sizes = [8, 1, 128], strides = [1, 1, 1]} : vector<8x8x128xf32> to vector<8x1x128xf32>
    %28 = vector.broadcast %26 : vector<1x8x128xf32> to vector<8x8x128xf32>
    %29 = vector.broadcast %27 : vector<8x1x128xf32> to vector<8x8x128xf32>
    %30 = arith.mulf %28, %29 : vector<8x8x128xf32>
    %31 = arith.addf %23, %30 : vector<8x8x128xf32>
    %32 = vector.extract_strided_slice %0 {offsets = [3, 0, 0], sizes = [1, 8, 128], strides = [1, 1, 1]} : vector<8x8x128xf32> to vector<1x8x128xf32>
    %33 = vector.shape_cast %32 : vector<1x8x128xf32> to vector<8x128xf32>
    %34 = vector.shape_cast %33 : vector<8x128xf32> to vector<1x8x128xf32>
    %35 = vector.extract_strided_slice %5 {offsets = [0, 3, 0], sizes = [8, 1, 128], strides = [1, 1, 1]} : vector<8x8x128xf32> to vector<8x1x128xf32>
    %36 = vector.broadcast %34 : vector<1x8x128xf32> to vector<8x8x128xf32>
    %37 = vector.broadcast %35 : vector<8x1x128xf32> to vector<8x8x128xf32>
    %38 = arith.mulf %36, %37 : vector<8x8x128xf32>
    %39 = arith.addf %31, %38 : vector<8x8x128xf32>
    %40 = vector.extract_strided_slice %0 {offsets = [4, 0, 0], sizes = [1, 8, 128], strides = [1, 1, 1]} : vector<8x8x128xf32> to vector<1x8x128xf32>
    %41 = vector.shape_cast %40 : vector<1x8x128xf32> to vector<8x128xf32>
    %42 = vector.shape_cast %41 : vector<8x128xf32> to vector<1x8x128xf32>
    %43 = vector.extract_strided_slice %5 {offsets = [0, 4, 0], sizes = [8, 1, 128], strides = [1, 1, 1]} : vector<8x8x128xf32> to vector<8x1x128xf32>
    %44 = vector.broadcast %42 : vector<1x8x128xf32> to vector<8x8x128xf32>
    %45 = vector.broadcast %43 : vector<8x1x128xf32> to vector<8x8x128xf32>
    %46 = arith.mulf %44, %45 : vector<8x8x128xf32>
    %47 = arith.addf %39, %46 : vector<8x8x128xf32>
    %48 = vector.extract_strided_slice %0 {offsets = [5, 0, 0], sizes = [1, 8, 128], strides = [1, 1, 1]} : vector<8x8x128xf32> to vector<1x8x128xf32>
    %49 = vector.shape_cast %48 : vector<1x8x128xf32> to vector<8x128xf32>
    %50 = vector.shape_cast %49 : vector<8x128xf32> to vector<1x8x128xf32>
    %51 = vector.extract_strided_slice %5 {offsets = [0, 5, 0], sizes = [8, 1, 128], strides = [1, 1, 1]} : vector<8x8x128xf32> to vector<8x1x128xf32>
    %52 = vector.broadcast %50 : vector<1x8x128xf32> to vector<8x8x128xf32>
    %53 = vector.broadcast %51 : vector<8x1x128xf32> to vector<8x8x128xf32>
    %54 = arith.mulf %52, %53 : vector<8x8x128xf32>
    %55 = arith.addf %47, %54 : vector<8x8x128xf32>
    %56 = vector.extract_strided_slice %0 {offsets = [6, 0, 0], sizes = [1, 8, 128], strides = [1, 1, 1]} : vector<8x8x128xf32> to vector<1x8x128xf32>
    %57 = vector.shape_cast %56 : vector<1x8x128xf32> to vector<8x128xf32>
    %58 = vector.shape_cast %57 : vector<8x128xf32> to vector<1x8x128xf32>
    %59 = vector.extract_strided_slice %5 {offsets = [0, 6, 0], sizes = [8, 1, 128], strides = [1, 1, 1]} : vector<8x8x128xf32> to vector<8x1x128xf32>
    %60 = vector.broadcast %58 : vector<1x8x128xf32> to vector<8x8x128xf32>
    %61 = vector.broadcast %59 : vector<8x1x128xf32> to vector<8x8x128xf32>
    %62 = arith.mulf %60, %61 : vector<8x8x128xf32>
    %63 = arith.addf %55, %62 : vector<8x8x128xf32>
    %64 = vector.extract_strided_slice %0 {offsets = [7, 0, 0], sizes = [1, 8, 128], strides = [1, 1, 1]} : vector<8x8x128xf32> to vector<1x8x128xf32>
    %65 = vector.shape_cast %64 : vector<1x8x128xf32> to vector<8x128xf32>
    %66 = vector.shape_cast %65 : vector<8x128xf32> to vector<1x8x128xf32>
    %67 = vector.extract_strided_slice %5 {offsets = [0, 7, 0], sizes = [8, 1, 128], strides = [1, 1, 1]} : vector<8x8x128xf32> to vector<8x1x128xf32>
    %68 = vector.broadcast %66 : vector<1x8x128xf32> to vector<8x8x128xf32>
    %69 = vector.broadcast %67 : vector<8x1x128xf32> to vector<8x8x128xf32>
    %70 = arith.mulf %68, %69 : vector<8x8x128xf32>
    %71 = arith.addf %63, %70 : vector<8x8x128xf32>
    %72 = arith.index_cast %3 : i32 to index
    %c0_6 = arith.constant 0 : index
    %c0_7 = arith.constant 0 : index
    %73 = vector.load %arg4[%72, %c0_6, %c0_7] : memref<8x8x128xf32, #tpu.memory_space<vmem>>, vector<8x8x128xf32>
    tpu.vector_store %arg4[%72, %c0_6, %c0_7], %71 {strides = array<i32>} : memref<8x8x128xf32, #tpu.memory_space<vmem>>, vector<8x8x128xf32>,
    %c1_i32 = arith.constant 1 : i32
    return
  }
  func.func @transform_0(%arg0: i32) -> (i32, i32, i32) {
    %c0_i32 = arith.constant 0 : i32
    %c0_i32_0 = arith.constant 0 : i32
    %c0_i32_1 = arith.constant 0 : i32
    %c0_i32_2 = arith.constant 0 : i32
    return %c0_i32, %c0_i32_0, %c0_i32_1 : i32, i32, i32
  }
  func.func @transform_1(%arg0: i32) -> (i32, i32) {
    %c0_i32 = arith.constant 0 : i32
    %c0_i32_0 = arith.constant 0 : i32
    %c0_i32_1 = arith.constant 0 : i32
    return %c0_i32, %c0_i32_0 : i32, i32
  }
  func.func @transform_2(%arg0: i32) -> (i32, i32, i32) {
    %c0_i32 = arith.constant 0 : i32
    %c0_i32_0 = arith.constant 0 : i32
    %c0_i32_1 = arith.constant 0 : i32
    return %arg0, %c0_i32, %c0_i32_0 : i32, i32, i32
  }
  func.func @transform_3(%arg0: i32) -> (i32, i32, i32) {
    %c0_i32 = arith.constant 0 : i32
    %c0_i32_0 = arith.constant 0 : i32
    %c0_i32_1 = arith.constant 0 : i32
    return %arg0, %c0_i32, %c0_i32_0 : i32, i32, i32
  }
}

</mosaic_0001>

<llo_original>
// kernel: tpu_custom_call.1
$region0: #{tpu_custom_call.1}
  #allocation0 [shape = 'u32[]', space=smem, size = 0x4, offset = 0x4, fixed_abs, tag = 'smem constant byte address 0x4 - core index']
  #allocation1 [shape = 'u32[144,128]{1,0:T(1,128)}', space=vmem, size = 0x12000, scoped, tag = 'internal scratch']
  %s0 = inlined_call_operand.hbm [shape: f32[8,8,128], index: 0, kind: input, shape index: {}]
  %s1 = inlined_call_operand.hbm [shape: f32[8,128], index: 1, kind: input, shape index: {}]
  %s2 = inlined_call_operand.hbm [shape: f32[8,8,128], index: 2, kind: input, shape index: {}]
  %s3 = inlined_call_operand.hbm [shape: f32[8,8,128], index: 3, kind: output, shape index: {}]
  %s4 = sld [smem:[#allocation0]]
  $region34: #{tpu_custom_call.1} parent=0
    _
  %s6 = ssub.s32 1, %s4
  %s7 = scalar_select 0, %s6, %s4
  $region1: #{tpu_custom_call.1} parent=0
    #allocation2 [shape = 'u8[32768]{0}', space=vmem, size = 0x8000, scoped, tag = 'input window, operand 0, single buffered']
    #allocation3 [shape = 's32[1]{0}', space=sflag, size = 0x4, scoped, tag = 'scoped memory for tpu_custom_call.1']
    #allocation4 [shape = 's32[1]{0}', space=sflag, size = 0x4, scoped, tag = 'scoped memory for tpu_custom_call.1']
    #allocation5 [shape = 'u8[4096]{0}', space=vmem, size = 0x1000, scoped, tag = 'input window, operand 1, single buffered']
    #allocation6 [shape = 's32[1]{0}', space=sflag, size = 0x4, scoped, tag = 'scoped memory for tpu_custom_call.1']
    #allocation7 [shape = 'u8[32768]{0}', space=vmem, size = 0x8000, scoped, tag = 'input window, operand 2, single buffered']
    #allocation8 [shape = 'u8[32768]{0}', space=vmem, size = 0x8000, scoped, tag = 'output window, operand 0, single buffered']
    %8 = vsyncpa [#allocation3], 0
    %9 = vsyncpa [#allocation6], 0
    %10 = vsyncpa [#allocation4], 0
    // Predicated region
    $region2: #{tpu_custom_call.1} parent=1 // pred_check
      _
    $region3: #{tpu_custom_call.1} parent=1 // pred_check_branch
      %12 = sbr.rel (0) target = $region5
    $region4: #{tpu_custom_call.1} parent=1 // pred_region
      %s14 = ssub.s32 1024, 1024
      %15 = vsyncadd [#allocation3], %s14
      %s16 = sshll.u32 [#allocation2], 4
      %s17 = int_to_ptr.vmem [resolvable:$true] %s16
      %22 = dma.hbm_to_vmem [thread:$0]  %s0, 1024, %s17, [#allocation3], 128, 128, 8
    $region5: #{tpu_custom_call.1} parent=1 // pred_fallthru
      _
    // Predicated region
    $region6: #{tpu_custom_call.1} parent=1 // pred_check
      _
    $region7: #{tpu_custom_call.1} parent=1 // pred_check_branch
      %24 = sbr.rel (0) target = $region9
    $region8: #{tpu_custom_call.1} parent=1 // pred_region
      %s26 = ssub.s32 128, 128
      %27 = vsyncadd [#allocation6], %s26
      %s29 = sshll.u32 [#allocation5], 4
      %s30 = int_to_ptr.vmem [resolvable:$true] %s29
      %32 = dma.hbm_to_vmem [thread:$0]  %s1, 128, %s30, [#allocation6]
    $region9: #{tpu_custom_call.1} parent=1 // pred_fallthru
      _
    // Predicated region
    $region10: #{tpu_custom_call.1} parent=1 // pred_check
      _
    $region11: #{tpu_custom_call.1} parent=1 // pred_check_branch
      %34 = sbr.rel (0) target = $region13
    $region12: #{tpu_custom_call.1} parent=1 // pred_region
      %s36 = ssub.s32 1024, 1024
      %37 = vsyncadd [#allocation6], %s36
      %s38 = sshll.u32 [#allocation7], 4
      %s39 = int_to_ptr.vmem [resolvable:$true] %s38
      %44 = dma.hbm_to_vmem [thread:$0]  %s2, 1024, %s39, [#allocation6], 128, 128, 8
    $region13: #{tpu_custom_call.1} parent=1 // pred_fallthru
      _
    // Predicated region
    $region14: #{tpu_custom_call.1} parent=1 // pred_check
      _
    $region15: #{tpu_custom_call.1} parent=1 // pred_check_branch
      %46 = sbr.rel (0) target = $region17
    $region16: #{tpu_custom_call.1} parent=1 // pred_region
      %47 = dma.done [#allocation3], 1024
    $region17: #{tpu_custom_call.1} parent=1 // pred_fallthru
      _
    // Predicated region
    $region18: #{tpu_custom_call.1} parent=1 // pred_check
      _
    $region19: #{tpu_custom_call.1} parent=1 // pred_check_branch
      %49 = sbr.rel (0) target = $region21
    $region20: #{tpu_custom_call.1} parent=1 // pred_region
      %50 = dma.done [#allocation6], 128
    $region21: #{tpu_custom_call.1} parent=1 // pred_fallthru
      _
    // Predicated region
    $region22: #{tpu_custom_call.1} parent=1 // pred_check
      _
    $region23: #{tpu_custom_call.1} parent=1 // pred_check_branch
      %52 = sbr.rel (0) target = $region25
    $region24: #{tpu_custom_call.1} parent=1 // pred_region
      %53 = dma.done [#allocation6], 1024
    $region25: #{tpu_custom_call.1} parent=1 // pred_fallthru
      _
    %v54 = vld [vmem:[#allocation2] sm:$0xff]
    %v55 = vld [vmem:[#allocation2 + $0x8] sm:$0xff]
    %v56 = vld [vmem:[#allocation2 + $0x10] sm:$0xff]
    %v57 = vld [vmem:[#allocation2 + $0x18] sm:$0xff]
    %v58 = vld [vmem:[#allocation2 + $0x20] sm:$0xff]
    %v59 = vld [vmem:[#allocation2 + $0x28] sm:$0xff]
    %v60 = vld [vmem:[#allocation2 + $0x30] sm:$0xff]
    %v61 = vld [vmem:[#allocation2 + $0x38] sm:$0xff]
    %v62 = vld [vmem:[#allocation5] sm:$0xff]
    %s63 = smul.u32 0, 8
    %s64 = scalar_lea.vmem [#allocation7], %s63
    %v65 = vld [vmem:[%s64] sm:$0xff]
    %v66 = vld [vmem:[%s64 + $0x8] sm:$0xff]
    %v67 = vld [vmem:[%s64 + $0x10] sm:$0xff]
    %v68 = vld [vmem:[%s64 + $0x18] sm:$0xff]
    %v69 = vld [vmem:[%s64 + $0x20] sm:$0xff]
    %v70 = vld [vmem:[%s64 + $0x28] sm:$0xff]
    %v71 = vld [vmem:[%s64 + $0x30] sm:$0xff]
    %v72 = vld [vmem:[%s64 + $0x38] sm:$0xff]
    %v73 = vlaneseq
    %v74 = vshrl.u32 %v73, 7
    %v75 = vsub.s32 0, %v74
    %v76 = vrot.slane %v65, %v75
    %v77 = vlaneseq
    %v78 = vshrl.u32 %v77, 7
    %v79 = vsub.s32 0, %v78
    %v80 = vrot.slane %v66, %v79
    %v81 = vlaneseq
    %v82 = vshrl.u32 %v81, 7
    %v83 = vsub.s32 0, %v82
    %v84 = vrot.slane %v67, %v83
    %v85 = vlaneseq
    %v86 = vshrl.u32 %v85, 7
    %v87 = vsub.s32 0, %v86
    %v88 = vrot.slane %v68, %v87
    %v89 = vlaneseq
    %v90 = vshrl.u32 %v89, 7
    %v91 = vsub.s32 0, %v90
    %v92 = vrot.slane %v69, %v91
    %v93 = vlaneseq
    %v94 = vshrl.u32 %v93, 7
    %v95 = vsub.s32 0, %v94
    %v96 = vrot.slane %v70, %v95
    %v97 = vlaneseq
    %v98 = vshrl.u32 %v97, 7
    %v99 = vsub.s32 0, %v98
    %v100 = vrot.slane %v71, %v99
    %v101 = vlaneseq
    %v102 = vshrl.u32 %v101, 7
    %v103 = vsub.s32 0, %v102
    %v104 = vrot.slane %v72, %v103
    %v105 = vmul.f32 %v54, %v76
    %v106 = vmul.f32 %v54, %v80
    %v107 = vmul.f32 %v54, %v84
    %v108 = vmul.f32 %v54, %v88
    %v109 = vmul.f32 %v54, %v92
    %v110 = vmul.f32 %v54, %v96
    %v111 = vmul.f32 %v54, %v100
    %v112 = vmul.f32 %v54, %v104
    %v113 = vadd.f32 %v62, %v105
    %v114 = vadd.f32 %v62, %v106
    %v115 = vadd.f32 %v62, %v107
    %v116 = vadd.f32 %v62, %v108
    %v117 = vadd.f32 %v62, %v109
    %v118 = vadd.f32 %v62, %v110
    %v119 = vadd.f32 %v62, %v111
    %v120 = vadd.f32 %v62, %v112
    %v121 = vlaneseq
    %v122 = vshrl.u32 %v121, 7
    %v123 = vsub.s32 1, %v122
    %v124 = vrot.slane %v65, %v123
    %v125 = vlaneseq
    %v126 = vshrl.u32 %v125, 7
    %v127 = vsub.s32 1, %v126
    %v128 = vrot.slane %v66, %v127
    %v129 = vlaneseq
    %v130 = vshrl.u32 %v129, 7
    %v131 = vsub.s32 1, %v130
    %v132 = vrot.slane %v67, %v131
    %v133 = vlaneseq
    %v134 = vshrl.u32 %v133, 7
    %v135 = vsub.s32 1, %v134
    %v136 = vrot.slane %v68, %v135
    %v137 = vlaneseq
    %v138 = vshrl.u32 %v137, 7
    %v139 = vsub.s32 1, %v138
    %v140 = vrot.slane %v69, %v139
    %v141 = vlaneseq
    %v142 = vshrl.u32 %v141, 7
    %v143 = vsub.s32 1, %v142
    %v144 = vrot.slane %v70, %v143
    %v145 = vlaneseq
    %v146 = vshrl.u32 %v145, 7
    %v147 = vsub.s32 1, %v146
    %v148 = vrot.slane %v71, %v147
    %v149 = vlaneseq
    %v150 = vshrl.u32 %v149, 7
    %v151 = vsub.s32 1, %v150
    %v152 = vrot.slane %v72, %v151
    %v153 = vmul.f32 %v55, %v124
    %v154 = vmul.f32 %v55, %v128
    %v155 = vmul.f32 %v55, %v132
    %v156 = vmul.f32 %v55, %v136
    %v157 = vmul.f32 %v55, %v140
    %v158 = vmul.f32 %v55, %v144
    %v159 = vmul.f32 %v55, %v148
    %v160 = vmul.f32 %v55, %v152
    %v161 = vadd.f32 %v113, %v153
    %v162 = vadd.f32 %v114, %v154
    %v163 = vadd.f32 %v115, %v155
    %v164 = vadd.f32 %v116, %v156
    %v165 = vadd.f32 %v117, %v157
    %v166 = vadd.f32 %v118, %v158
    %v167 = vadd.f32 %v119, %v159
    %v168 = vadd.f32 %v120, %v160
    %v169 = vlaneseq
    %v170 = vshrl.u32 %v169, 7
    %v171 = vsub.s32 2, %v170
    %v172 = vrot.slane %v65, %v171
    %v173 = vlaneseq
    %v174 = vshrl.u32 %v173, 7
    %v175 = vsub.s32 2, %v174
    %v176 = vrot.slane %v66, %v175
    %v177 = vlaneseq
    %v178 = vshrl.u32 %v177, 7
    %v179 = vsub.s32 2, %v178
    %v180 = vrot.slane %v67, %v179
    %v181 = vlaneseq
    %v182 = vshrl.u32 %v181, 7
    %v183 = vsub.s32 2, %v182
    %v184 = vrot.slane %v68, %v183
    %v185 = vlaneseq
    %v186 = vshrl.u32 %v185, 7
    %v187 = vsub.s32 2, %v186
    %v188 = vrot.slane %v69, %v187
    %v189 = vlaneseq
    %v190 = vshrl.u32 %v189, 7
    %v191 = vsub.s32 2, %v190
    %v192 = vrot.slane %v70, %v191
    %v193 = vlaneseq
    %v194 = vshrl.u32 %v193, 7
    %v195 = vsub.s32 2, %v194
    %v196 = vrot.slane %v71, %v195
    %v197 = vlaneseq
    %v198 = vshrl.u32 %v197, 7
    %v199 = vsub.s32 2, %v198
    %v200 = vrot.slane %v72, %v199
    %v201 = vmul.f32 %v56, %v172
    %v202 = vmul.f32 %v56, %v176
    %v203 = vmul.f32 %v56, %v180
    %v204 = vmul.f32 %v56, %v184
    %v205 = vmul.f32 %v56, %v188
    %v206 = vmul.f32 %v56, %v192
    %v207 = vmul.f32 %v56, %v196
    %v208 = vmul.f32 %v56, %v200
    %v209 = vadd.f32 %v161, %v201
    %v210 = vadd.f32 %v162, %v202
    %v211 = vadd.f32 %v163, %v203
    %v212 = vadd.f32 %v164, %v204
    %v213 = vadd.f32 %v165, %v205
    %v214 = vadd.f32 %v166, %v206
    %v215 = vadd.f32 %v167, %v207
    %v216 = vadd.f32 %v168, %v208
    %v217 = vlaneseq
    %v218 = vshrl.u32 %v217, 7
    %v219 = vsub.s32 3, %v218
    %v220 = vrot.slane %v65, %v219
    %v221 = vlaneseq
    %v222 = vshrl.u32 %v221, 7
    %v223 = vsub.s32 3, %v222
    %v224 = vrot.slane %v66, %v223
    %v225 = vlaneseq
    %v226 = vshrl.u32 %v225, 7
    %v227 = vsub.s32 3, %v226
    %v228 = vrot.slane %v67, %v227
    %v229 = vlaneseq
    %v230 = vshrl.u32 %v229, 7
    %v231 = vsub.s32 3, %v230
    %v232 = vrot.slane %v68, %v231
    %v233 = vlaneseq
    %v234 = vshrl.u32 %v233, 7
    %v235 = vsub.s32 3, %v234
    %v236 = vrot.slane %v69, %v235
    %v237 = vlaneseq
    %v238 = vshrl.u32 %v237, 7
    %v239 = vsub.s32 3, %v238
    %v240 = vrot.slane %v70, %v239
    %v241 = vlaneseq
    %v242 = vshrl.u32 %v241, 7
    %v243 = vsub.s32 3, %v242
    %v244 = vrot.slane %v71, %v243
    %v245 = vlaneseq
    %v246 = vshrl.u32 %v245, 7
    %v247 = vsub.s32 3, %v246
    %v248 = vrot.slane %v72, %v247
    %v249 = vmul.f32 %v57, %v220
    %v250 = vmul.f32 %v57, %v224
    %v251 = vmul.f32 %v57, %v228
    %v252 = vmul.f32 %v57, %v232
    %v253 = vmul.f32 %v57, %v236
    %v254 = vmul.f32 %v57, %v240
    %v255 = vmul.f32 %v57, %v244
    %v256 = vmul.f32 %v57, %v248
    %v257 = vadd.f32 %v209, %v249
    %v258 = vadd.f32 %v210, %v250
    %v259 = vadd.f32 %v211, %v251
    %v260 = vadd.f32 %v212, %v252
    %v261 = vadd.f32 %v213, %v253
    %v262 = vadd.f32 %v214, %v254
    %v263 = vadd.f32 %v215, %v255
    %v264 = vadd.f32 %v216, %v256
    %v265 = vlaneseq
    %v266 = vshrl.u32 %v265, 7
    %v267 = vsub.s32 4, %v266
    %v268 = vrot.slane %v65, %v267
    %v269 = vlaneseq
    %v270 = vshrl.u32 %v269, 7
    %v271 = vsub.s32 4, %v270
    %v272 = vrot.slane %v66, %v271
    %v273 = vlaneseq
    %v274 = vshrl.u32 %v273, 7
    %v275 = vsub.s32 4, %v274
    %v276 = vrot.slane %v67, %v275
    %v277 = vlaneseq
    %v278 = vshrl.u32 %v277, 7
    %v279 = vsub.s32 4, %v278
    %v280 = vrot.slane %v68, %v279
    %v281 = vlaneseq
    %v282 = vshrl.u32 %v281, 7
    %v283 = vsub.s32 4, %v282
    %v284 = vrot.slane %v69, %v283
    %v285 = vlaneseq
    %v286 = vshrl.u32 %v285, 7
    %v287 = vsub.s32 4, %v286
    %v288 = vrot.slane %v70, %v287
    %v289 = vlaneseq
    %v290 = vshrl.u32 %v289, 7
    %v291 = vsub.s32 4, %v290
    %v292 = vrot.slane %v71, %v291
    %v293 = vlaneseq
    %v294 = vshrl.u32 %v293, 7
    %v295 = vsub.s32 4, %v294
    %v296 = vrot.slane %v72, %v295
    %v297 = vmul.f32 %v58, %v268
    %v298 = vmul.f32 %v58, %v272
    %v299 = vmul.f32 %v58, %v276
    %v300 = vmul.f32 %v58, %v280
    %v301 = vmul.f32 %v58, %v284
    %v302 = vmul.f32 %v58, %v288
    %v303 = vmul.f32 %v58, %v292
    %v304 = vmul.f32 %v58, %v296
    %v305 = vadd.f32 %v257, %v297
    %v306 = vadd.f32 %v258, %v298
    %v307 = vadd.f32 %v259, %v299
    %v308 = vadd.f32 %v260, %v300
    %v309 = vadd.f32 %v261, %v301
    %v310 = vadd.f32 %v262, %v302
    %v311 = vadd.f32 %v263, %v303
    %v312 = vadd.f32 %v264, %v304
    %v313 = vlaneseq
    %v314 = vshrl.u32 %v313, 7
    %v315 = vsub.s32 5, %v314
    %v316 = vrot.slane %v65, %v315
    %v317 = vlaneseq
    %v318 = vshrl.u32 %v317, 7
    %v319 = vsub.s32 5, %v318
    %v320 = vrot.slane %v66, %v319
    %v321 = vlaneseq
    %v322 = vshrl.u32 %v321, 7
    %v323 = vsub.s32 5, %v322
    %v324 = vrot.slane %v67, %v323
    %v325 = vlaneseq
    %v326 = vshrl.u32 %v325, 7
    %v327 = vsub.s32 5, %v326
    %v328 = vrot.slane %v68, %v327
    %v329 = vlaneseq
    %v330 = vshrl.u32 %v329, 7
    %v331 = vsub.s32 5, %v330
    %v332 = vrot.slane %v69, %v331
    %v333 = vlaneseq
    %v334 = vshrl.u32 %v333, 7
    %v335 = vsub.s32 5, %v334
    %v336 = vrot.slane %v70, %v335
    %v337 = vlaneseq
    %v338 = vshrl.u32 %v337, 7
    %v339 = vsub.s32 5, %v338
    %v340 = vrot.slane %v71, %v339
    %v341 = vlaneseq
    %v342 = vshrl.u32 %v341, 7
    %v343 = vsub.s32 5, %v342
    %v344 = vrot.slane %v72, %v343
    %v345 = vmul.f32 %v59, %v316
    %v346 = vmul.f32 %v59, %v320
    %v347 = vmul.f32 %v59, %v324
    %v348 = vmul.f32 %v59, %v328
    %v349 = vmul.f32 %v59, %v332
    %v350 = vmul.f32 %v59, %v336
    %v351 = vmul.f32 %v59, %v340
    %v352 = vmul.f32 %v59, %v344
    %v353 = vadd.f32 %v305, %v345
    %v354 = vadd.f32 %v306, %v346
    %v355 = vadd.f32 %v307, %v347
    %v356 = vadd.f32 %v308, %v348
    %v357 = vadd.f32 %v309, %v349
    %v358 = vadd.f32 %v310, %v350
    %v359 = vadd.f32 %v311, %v351
    %v360 = vadd.f32 %v312, %v352
    %v361 = vlaneseq
    %v362 = vshrl.u32 %v361, 7
    %v363 = vsub.s32 6, %v362
    %v364 = vrot.slane %v65, %v363
    %v365 = vlaneseq
    %v366 = vshrl.u32 %v365, 7
    %v367 = vsub.s32 6, %v366
    %v368 = vrot.slane %v66, %v367
    %v369 = vlaneseq
    %v370 = vshrl.u32 %v369, 7
    %v371 = vsub.s32 6, %v370
    %v372 = vrot.slane %v67, %v371
    %v373 = vlaneseq
    %v374 = vshrl.u32 %v373, 7
    %v375 = vsub.s32 6, %v374
    %v376 = vrot.slane %v68, %v375
    %v377 = vlaneseq
    %v378 = vshrl.u32 %v377, 7
    %v379 = vsub.s32 6, %v378
    %v380 = vrot.slane %v69, %v379
    %v381 = vlaneseq
    %v382 = vshrl.u32 %v381, 7
    %v383 = vsub.s32 6, %v382
    %v384 = vrot.slane %v70, %v383
    %v385 = vlaneseq
    %v386 = vshrl.u32 %v385, 7
    %v387 = vsub.s32 6, %v386
    %v388 = vrot.slane %v71, %v387
    %v389 = vlaneseq
    %v390 = vshrl.u32 %v389, 7
    %v391 = vsub.s32 6, %v390
    %v392 = vrot.slane %v72, %v391
    %v393 = vmul.f32 %v60, %v364
    %v394 = vmul.f32 %v60, %v368
    %v395 = vmul.f32 %v60, %v372
    %v396 = vmul.f32 %v60, %v376
    %v397 = vmul.f32 %v60, %v380
    %v398 = vmul.f32 %v60, %v384
    %v399 = vmul.f32 %v60, %v388
    %v400 = vmul.f32 %v60, %v392
    %v401 = vadd.f32 %v353, %v393
    %v402 = vadd.f32 %v354, %v394
    %v403 = vadd.f32 %v355, %v395
    %v404 = vadd.f32 %v356, %v396
    %v405 = vadd.f32 %v357, %v397
    %v406 = vadd.f32 %v358, %v398
    %v407 = vadd.f32 %v359, %v399
    %v408 = vadd.f32 %v360, %v400
    %v409 = vlaneseq
    %v410 = vshrl.u32 %v409, 7
    %v411 = vsub.s32 7, %v410
    %v412 = vrot.slane %v65, %v411
    %v413 = vlaneseq
    %v414 = vshrl.u32 %v413, 7
    %v415 = vsub.s32 7, %v414
    %v416 = vrot.slane %v66, %v415
    %v417 = vlaneseq
    %v418 = vshrl.u32 %v417, 7
    %v419 = vsub.s32 7, %v418
    %v420 = vrot.slane %v67, %v419
    %v421 = vlaneseq
    %v422 = vshrl.u32 %v421, 7
    %v423 = vsub.s32 7, %v422
    %v424 = vrot.slane %v68, %v423
    %v425 = vlaneseq
    %v426 = vshrl.u32 %v425, 7
    %v427 = vsub.s32 7, %v426
    %v428 = vrot.slane %v69, %v427
    %v429 = vlaneseq
    %v430 = vshrl.u32 %v429, 7
    %v431 = vsub.s32 7, %v430
    %v432 = vrot.slane %v70, %v431
    %v433 = vlaneseq
    %v434 = vshrl.u32 %v433, 7
    %v435 = vsub.s32 7, %v434
    %v436 = vrot.slane %v71, %v435
    %v437 = vlaneseq
    %v438 = vshrl.u32 %v437, 7
    %v439 = vsub.s32 7, %v438
    %v440 = vrot.slane %v72, %v439
    %v441 = vmul.f32 %v61, %v412
    %v442 = vmul.f32 %v61, %v416
    %v443 = vmul.f32 %v61, %v420
    %v444 = vmul.f32 %v61, %v424
    %v445 = vmul.f32 %v61, %v428
    %v446 = vmul.f32 %v61, %v432
    %v447 = vmul.f32 %v61, %v436
    %v448 = vmul.f32 %v61, %v440
    %v449 = vadd.f32 %v401, %v441
    %v450 = vadd.f32 %v402, %v442
    %v451 = vadd.f32 %v403, %v443
    %v452 = vadd.f32 %v404, %v444
    %v453 = vadd.f32 %v405, %v445
    %v454 = vadd.f32 %v406, %v446
    %v455 = vadd.f32 %v407, %v447
    %v456 = vadd.f32 %v408, %v448
    %s457 = scalar_lea.vmem [#allocation8], %s63
    %458 = vst [vmem:[%s457] sm:$0xff] %v449
    %459 = vst [vmem:[%s457 + $0x8] sm:$0xff] %v450
    %460 = vst [vmem:[%s457 + $0x10] sm:$0xff] %v451
    %461 = vst [vmem:[%s457 + $0x18] sm:$0xff] %v452
    %462 = vst [vmem:[%s457 + $0x20] sm:$0xff] %v453
    %463 = vst [vmem:[%s457 + $0x28] sm:$0xff] %v454
    %464 = vst [vmem:[%s457 + $0x30] sm:$0xff] %v455
    %465 = vst [vmem:[%s457 + $0x38] sm:$0xff] %v456
    // Predicated region
    $region26: #{tpu_custom_call.1} parent=1 // pred_check
      _
    $region27: #{tpu_custom_call.1} parent=1 // pred_check_branch
      %467 = sbr.rel (0) target = $region29
    $region28: #{tpu_custom_call.1} parent=1 // pred_region
      %s469 = ssub.s32 1024, 1024
      %470 = vsyncadd [#allocation4], %s469
      %s471 = sshll.u32 [#allocation8], 4
      %s472 = int_to_ptr.vmem [resolvable:$true] %s471
      %477 = dma.vmem_to_hbm [thread:$0]  %s472, 1024, %s3, [#allocation4], 128, 128, 8
    $region29: #{tpu_custom_call.1} parent=1 // pred_fallthru
      _
    // Predicated region
    $region30: #{tpu_custom_call.1} parent=1 // pred_check
      _
    $region31: #{tpu_custom_call.1} parent=1 // pred_check_branch
      %479 = sbr.rel (0) target = $region33
    $region32: #{tpu_custom_call.1} parent=1 // pred_region
      %480 = dma.done [#allocation4], 1024
    $region33: #{tpu_custom_call.1} parent=1 // pred_fallthru
      _
    %481 = vsyncpa [#allocation3], 1
    %482 = vsyncpa [#allocation6], 1
    %483 = vsyncpa [#allocation4], 1

</llo_original>
